<compile_context>
chip_gen: v5e
topology: v5e:2x2
jax: 0.10.0
libtpu: 0.0.40
codegen_flags: <defaults>
</compile_context>

<pallas_src>
import functools

import jax
import jax.numpy as jnp
from jax.experimental import pallas as pl
from jax.experimental.pallas import tpu as pltpu

_LANES = 128
_ROW_ALIGN = 32           # keeps bf16/int8 native (16/32, 128) VMEM tiling
_MAX_TILE_ROWS = 2048     # 1 MiB f32 tiles; 3 inputs x 2 buffers = 6 MiB VMEM
_SMALL_N = 1 << 17        # below this, XLA's fused reduction wins (dispatch/pad)


def _round_up(x, m):
    return ((x + m - 1) // m) * m


@functools.lru_cache(maxsize=None)
def _multi_tensorcore():
    """Best effort: does this chip have >1 TensorCore (v7x / megacore parts)?

    With the pad-free tiling below, a 2-way "parallel" split costs nothing on
    1-TC chips (same blocks, pure sequential loop), so default to True when
    the query is unavailable.
    """
    try:
        info = pltpu.get_tpu_info()
        for attr in ("num_cores", "core_count", "num_tensorcores",
                     "tensorcore_count", "num_tensor_cores"):
            v = getattr(info, attr, None)
            if isinstance(v, int) and v > 0:
                return v > 1
    except Exception:
        pass
    return True


def _mse_sum_kernel(*args, num_preds, steps_per_split, tile_rows, valid_rows):
    """Accumulates sum((pred - target)^2) for `num_preds` predictions.

    Ref order: [pred_0..pred_{P-1}, target, out_0..out_{P-1}, acc_0..acc_{P-1}]
    grid = (num_splits, steps_per_split): axis 0 is "parallel" (megacore shard
    on 2-TC chips), axis 1 is the sequential reduction. Each split keeps an
    (8, 128) vreg-shaped f32 accumulator per prediction and writes it to its
    own (8, 128) output block on its last step; the wrapper finishes the tiny
    cross-lane/sublane reduce and divides by the true element count.
    """
    pred_refs = args[:num_preds]
    t_ref = args[num_preds]
    out_refs = args[num_preds + 1: 2 * num_preds + 1]
    acc_refs = args[2 * num_preds + 1:]

    step = pl.program_id(1)

    @pl.when(step == 0)
    def _():
        for acc in acc_refs:
            acc[...] = jnp.zeros_like(acc)

    t = t_ref[...].astype(jnp.float32)

    mask = None
    if valid_rows is not None:
        # Row-direction tail of the last (partial) block: out-of-bounds rows
        # contain garbage, so mask them out before accumulating.
        row0 = (pl.program_id(0) * steps_per_split + step) * tile_rows
        row_ids = row0 + jax.lax.broadcasted_iota(jnp.int32, t.shape, 0)
        mask = row_ids < valid_rows

    for p_ref, acc in zip(pred_refs, acc_refs):
        d = p_ref[...].astype(jnp.float32) - t
        dd = d * d
        if mask is not None:
            dd = jnp.where(mask, dd, 0.0)
        if tile_rows % 8 == 0:
            # Pure vreg-wise adds: (tile_rows,128) -> (tile_rows//8, 8, 128)
            # is tile-granular (no relayout); summing axis 0 adds whole vregs.
            acc[...] += jnp.sum(dd.reshape(-1, 8, _LANES), axis=0)
        else:
            # Tiny full-dim single-block case (rows not a multiple of 8).
            acc[0:1, :] = acc[0:1, :] + jnp.sum(dd, axis=0, keepdims=True)

    @pl.when(step == pl.num_programs(1) - 1)
    def _():
        for out, acc in zip(out_refs, acc_refs):
            out[...] = acc[...]


def mse_pallas(preds, targets, *, max_tile_rows=_MAX_TILE_ROWS,
               force_pallas=False, input_buffers=None):
    """Returns [mean((p - targets)**2) for p in preds] via one fused kernel."""
    targets = jnp.asarray(targets)
    preds = [jnp.asarray(p) for p in preds]
    for p in preds:
        assert p.shape == targets.shape, (p.shape, targets.shape)
    n = int(targets.size)
    num_preds = len(preds)

    # Plain JAX when the kernel has no structural advantage:
    #  * small n: pallas_call dispatch dominates;
    #  * a single prediction: XLA's fused mean((p-t)**2) is already a one-pass
    #    memory-bound reduction at roofline (the fused kernel only saves HBM
    #    traffic when `targets` is shared by coarse + fine).
    if not force_pallas and (n < _SMALL_N or num_preds == 1):
        tf = targets.astype(jnp.float32)
        return [jnp.mean((p.astype(jnp.float32) - tf) ** 2) for p in preds]

    rows = pl.cdiv(n, _LANES)          # rows of the (rows, 128) lane-dense view
    lane_pad = (-n) % _LANES           # <=127 zeros, only when n % 128 != 0

    def to2d(a):
        flat = a.reshape(-1)
        if lane_pad:
            # TODO(synk): this <=127-element pad still costs one HBM copy of
            # the array; a fully copy-free ragged-lane path needs a manual-DMA
            # 1-D kernel.
            flat = jnp.pad(flat, (0, lane_pad))
        return flat.reshape(rows, _LANES)

    # Tile sizing. Row tiles aligned to 32 for sub-f32 native tiling; if the
    # whole problem fits in one tile, use the exact row extent (a block equal
    # to the full array dim is always legal, no divisibility requirement).
    cap = _round_up(max(int(max_tile_rows), _ROW_ALIGN), _ROW_ALIGN)
    if rows <= cap:
        tile_rows = rows
        num_steps = 1
    else:
        tile_rows = cap
        num_steps = pl.cdiv(rows, tile_rows)

    # Row-direction tail handled in-kernel (mask), never by padding rows.
    valid_rows = rows if num_steps * tile_rows != rows else None

    # 2-way megacore split only when the chip has >1 TensorCore and the step
    # count divides evenly, so no block maps fully out of bounds and no extra
    # rows are streamed from HBM.
    num_splits = 2 if (_multi_tensorcore() and num_steps >= 2
                       and num_steps % 2 == 0) else 1
    steps_per_split = num_steps // num_splits
    grid = (num_splits, steps_per_split)

    call_args = [to2d(p) for p in preds] + [to2d(targets)]

    def in_idx(c, i):
        return (c * steps_per_split + i, 0)

    if input_buffers is not None and input_buffers != 2:
        # Optional deeper input pipelining (e.g. sweep pl.Buffered(3) on v7x).
        in_spec = pl.BlockSpec((tile_rows, _LANES), in_idx,
                               pipeline_mode=pl.Buffered(int(input_buffers)))
    else:
        in_spec = pl.BlockSpec((tile_rows, _LANES), in_idx)
    out_spec = pl.BlockSpec((8, _LANES), lambda c, i: (c, 0))

    kernel = functools.partial(
        _mse_sum_kernel, num_preds=num_preds, steps_per_split=steps_per_split,
        tile_rows=tile_rows, valid_rows=valid_rows)

    outs = pl.pallas_call(
        kernel,
        out_shape=tuple(
            jax.ShapeDtypeStruct((num_splits * 8, _LANES), jnp.float32)
            for _ in range(num_preds)),
        grid_spec=pltpu.PrefetchScalarGridSpec(
            num_scalar_prefetch=0,
            grid=grid,
            in_specs=[in_spec] * (num_preds + 1),
            out_specs=tuple(out_spec for _ in range(num_preds)),
            scratch_shapes=[pltpu.VMEM((8, _LANES), jnp.float32)
                            for _ in range(num_preds)],
        ),
        compiler_params=pltpu.CompilerParams(
            dimension_semantics=("parallel", "arbitrary"),
        ),
    )(*call_args)

    inv_n = 1.0 / float(n)
    # Each split wrote one (8,128) vreg of partial sums (masked/padded rows
    # contributed zero); finish the tiny reduce here and divide by the true n.
    return [jnp.sum(o) * inv_n for o in outs]


def mse2psnr(mse):
    # -10 * log(mse) / log(10); shape (1,) matches torch.tensor([10.0]) bcast.
    return (-10.0 * jnp.log(mse) / jnp.log(10.0)).reshape(1)


def mse_loss_forward(inputs, targets, *, force_pallas=False):
    """Pallas equivalent of MSELoss.forward."""
    has_fine = "fine" in inputs
    preds = [inputs["coarse"]["rgb_map"]]
    if has_fine:
        preds.append(inputs["fine"]["rgb_map"])
    # One fused call: `targets` streams from HBM exactly once for both preds.
    losses = mse_pallas(preds, targets, force_pallas=force_pallas)
    coarse_loss = losses[0]
    fine_loss = losses[1] if has_fine else -1
    # "with torch.no_grad()" -> stop_gradient on psnr values.
    coarse_psnr = mse2psnr(jax.lax.stop_gradient(coarse_loss))
    fine_psnr = mse2psnr(jax.lax.stop_gradient(fine_loss)) if has_fine else -1
    return coarse_loss, fine_loss, coarse_psnr, fine_psnr


if __name__ == "__main__":
    key = jax.random.PRNGKey(0)
    k1, k2, k3 = jax.random.split(key, 3)

    # NeRF-style ray batch: [N_rays, 3] rgb. 2048 rays -> 6144 elements.
    n_rays = 2048
    coarse_rgb = jax.random.uniform(k1, (n_rays, 3), jnp.float32)
    fine_rgb = jax.random.uniform(k2, (n_rays, 3), jnp.float32)
    targets = jax.random.uniform(k3, (n_rays, 3), jnp.float32)

    inputs = {"coarse": {"rgb_map": coarse_rgb},
              "fine": {"rgb_map": fine_rgb}}

    # force_pallas so the fused kernel actually runs at this demo size
    # (6144 elements is below the small-N plain-JAX crossover).
    coarse_loss, fine_loss, coarse_psnr, fine_psnr = mse_loss_forward(
        inputs, targets, force_pallas=True)
    jax.block_until_ready((coarse_loss, fine_loss, coarse_psnr, fine_psnr))

    ref_c = jnp.mean((coarse_rgb - targets) ** 2)
    ref_f = jnp.mean((fine_rgb - targets) ** 2)
    assert jnp.allclose(coarse_loss, ref_c, rtol=1e-5, atol=1e-6)
    assert jnp.allclose(fine_loss, ref_f, rtol=1e-5, atol=1e-6)
    assert jnp.allclose(coarse_psnr, -10.0 * jnp.log(ref_c) / jnp.log(10.0),
                        rtol=1e-5, atol=1e-5)
    assert jnp.allclose(fine_psnr, -10.0 * jnp.log(ref_f) / jnp.log(10.0),
                        rtol=1e-5, atol=1e-5)

    # Multi-step masked accumulation (+ 2-way split when available):
    # 48 rows with 32-row tiles -> 2 blocks, last block row-masked in-kernel.
    multi = mse_pallas([coarse_rgb, fine_rgb], targets,
                       max_tile_rows=8, force_pallas=True)
    jax.block_until_ready(multi)
    assert jnp.allclose(multi[0], ref_c, rtol=1e-5, atol=1e-6)
    assert jnp.allclose(multi[1], ref_f, rtol=1e-5, atol=1e-6)

    # Ragged size (n not a multiple of 128) -> <=127-element lane pad only.
    xr = jax.random.uniform(k1, (333, 3), jnp.float32)
    yr = jax.random.uniform(k2, (333, 3), jnp.float32)
    ragged = mse_pallas([xr], yr, force_pallas=True)
    jax.block_until_ready(ragged)
    assert jnp.allclose(ragged[0], jnp.mean((xr - yr) ** 2),
                        rtol=1e-5, atol=1e-6)

    # Tiny input whose row count is not a multiple of 8 (full-dim block path).
    xt = jax.random.uniform(k1, (130,), jnp.float32)
    yt = jax.random.uniform(k2, (130,), jnp.float32)
    tiny = mse_pallas([xt], yt, force_pallas=True)
    jax.block_until_ready(tiny)
    assert jnp.allclose(tiny[0], jnp.mean((xt - yt) ** 2),
                        rtol=1e-5, atol=1e-6)

    # Native-dtype streaming (bf16 inputs, f32 accumulation in-kernel).
    cb = coarse_rgb.astype(jnp.bfloat16)
    fb = fine_rgb.astype(jnp.bfloat16)
    tb = targets.astype(jnp.bfloat16)
    bf = mse_pallas([cb, fb], tb, force_pallas=True)
    jax.block_until_ready(bf)
    ref_cb = jnp.mean((cb.astype(jnp.float32) - tb.astype(jnp.float32)) ** 2)
    ref_fb = jnp.mean((fb.astype(jnp.float32) - tb.astype(jnp.float32)) ** 2)
    assert jnp.allclose(bf[0], ref_cb, rtol=1e-4, atol=1e-6)
    assert jnp.allclose(bf[1], ref_fb, rtol=1e-4, atol=1e-6)

    # Coarse-only + small-N: plain-JAX fast path, -1 sentinels preserved.
    small_inputs = {"coarse": {"rgb_map": coarse_rgb[:256]}}
    cl, fl, cp, fp = mse_loss_forward(small_inputs, targets[:256])
    jax.block_until_ready((cl, cp))
    assert fl == -1 and fp == -1
    assert jnp.allclose(cl, jnp.mean((coarse_rgb[:256] - targets[:256]) ** 2),
                        rtol=1e-5, atol=1e-6)

    print("KERNEL_OK")
</pallas_src>

<mosaic_0001>
module attributes {stable_mosaic.version = 11 : i64} {
  func.func @_mse_sum_kernel(%arg0: i32, %arg1: i32, %arg2: memref<48x128xf32, #tpu.memory_space<vmem>>, %arg3: memref<48x128xf32, #tpu.memory_space<vmem>>, %arg4: memref<48x128xf32, #tpu.memory_space<vmem>>, %arg5: memref<8x128xf32, #tpu.memory_space<vmem>>, %arg6: memref<8x128xf32, #tpu.memory_space<vmem>>, %arg7: memref<8x128xf32, #tpu.memory_space<vmem>>, %arg8: memref<8x128xf32, #tpu.memory_space<vmem>>) attributes {dimension_semantics = [#tpu.dimension_semantics<parallel>, #tpu.dimension_semantics<arbitrary>], iteration_bounds = array<i64: 1, 1>, scalar_prefetch = 0 : i64, scratch_operands = 2 : i64, tpu.core_type = #tpu.core_type<tc>, window_params = [{transform_indices = @transform_0, window_bounds = array<i64: 48, 128>}, {transform_indices = @transform_1, window_bounds = array<i64: 48, 128>}, {transform_indices = @transform_2, window_bounds = array<i64: 48, 128>}, {transform_indices = @transform_3, window_bounds = array<i64: 8, 128>}, {transform_indices = @transform_4, window_bounds = array<i64: 8, 128>}]} {
    %c0_i32 = arith.constant 0 : i32
    %0 = arith.cmpi eq, %arg1, %c0_i32 : i32
    %1 = arith.extui %0 : i1 to i32
    %c0_i32_0 = arith.constant 0 : i32
    %2 = arith.cmpi ne, %1, %c0_i32_0 : i32
    scf.if %2 {
      %cst_17 = arith.constant 0.000000e+00 : f32
      %23 = vector.broadcast %cst_17 : f32 to vector<8x128xf32>
      %c0_18 = arith.constant 0 : index
      %c0_19 = arith.constant 0 : index
      %24 = vector.load %arg7[%c0_18, %c0_19] : memref<8x128xf32, #tpu.memory_space<vmem>>, vector<8x128xf32>
      tpu.vector_store %arg7[%c0_18, %c0_19], %23 {strides = array<i32>} : memref<8x128xf32, #tpu.memory_space<vmem>>, vector<8x128xf32>,
      %cst_20 = arith.constant 0.000000e+00 : f32
      %25 = vector.broadcast %cst_20 : f32 to vector<8x128xf32>
      %c0_21 = arith.constant 0 : index
      %c0_22 = arith.constant 0 : index
      %26 = vector.load %arg8[%c0_21, %c0_22] : memref<8x128xf32, #tpu.memory_space<vmem>>, vector<8x128xf32>
      tpu.vector_store %arg8[%c0_21, %c0_22], %25 {strides = array<i32>} : memref<8x128xf32, #tpu.memory_space<vmem>>, vector<8x128xf32>,
    } else {
    }
    %c0 = arith.constant 0 : index
    %c0_1 = arith.constant 0 : index
    %3 = vector.load %arg4[%c0, %c0_1] : memref<48x128xf32, #tpu.memory_space<vmem>>, vector<48x128xf32>
    %c0_2 = arith.constant 0 : index
    %c0_3 = arith.constant 0 : index
    %4 = vector.load %arg2[%c0_2, %c0_3] : memref<48x128xf32, #tpu.memory_space<vmem>>, vector<48x128xf32>
    %5 = arith.subf %4, %3 : vector<48x128xf32>
    %6 = arith.mulf %5, %5 : vector<48x128xf32>
    %c0_4 = arith.constant 0 : index
    %c0_5 = arith.constant 0 : index
    %7 = vector.load %arg7[%c0_4, %c0_5] : memref<8x128xf32, #tpu.memory_space<vmem>>, vector<8x128xf32>
    %8 = vector.shape_cast %6 : vector<48x128xf32> to vector<6x8x128xf32>
    %cst = arith.constant dense<0.000000e+00> : vector<8x128xf32>
    %9 = vector.multi_reduction <add>, %8, %cst [0] : vector<6x8x128xf32> to vector<8x128xf32>
    %10 = arith.addf %7, %9 : vector<8x128xf32>
    %c0_6 = arith.constant 0 : index
    %c0_7 = arith.constant 0 : index
    %11 = vector.load %arg7[%c0_6, %c0_7] : memref<8x128xf32, #tpu.memory_space<vmem>>, vector<8x128xf32>
    tpu.vector_store %arg7[%c0_6, %c0_7], %10 {strides = array<i32>} : memref<8x128xf32, #tpu.memory_space<vmem>>, vector<8x128xf32>,
    %c0_8 = arith.constant 0 : index
    %c0_9 = arith.constant 0 : index
    %12 = vector.load %arg3[%c0_8, %c0_9] : memref<48x128xf32, #tpu.memory_space<vmem>>, vector<48x128xf32>
    %13 = arith.subf %12, %3 : vector<48x128xf32>
    %14 = arith.mulf %13, %13 : vector<48x128xf32>
    %c0_10 = arith.constant 0 : index
    %c0_11 = arith.constant 0 : index
    %15 = vector.load %arg8[%c0_10, %c0_11] : memref<8x128xf32, #tpu.memory_space<vmem>>, vector<8x128xf32>
    %16 = vector.shape_cast %14 : vector<48x128xf32> to vector<6x8x128xf32>
    %cst_12 = arith.constant dense<0.000000e+00> : vector<8x128xf32>
    %17 = vector.multi_reduction <add>, %16, %cst_12 [0] : vector<6x8x128xf32> to vector<8x128xf32>
    %18 = arith.addf %15, %17 : vector<8x128xf32>
    %c0_13 = arith.constant 0 : index
    %c0_14 = arith.constant 0 : index
    %19 = vector.load %arg8[%c0_13, %c0_14] : memref<8x128xf32, #tpu.memory_space<vmem>>, vector<8x128xf32>
    tpu.vector_store %arg8[%c0_13, %c0_14], %18 {strides = array<i32>} : memref<8x128xf32, #tpu.memory_space<vmem>>, vector<8x128xf32>,
    %c0_i32_15 = arith.constant 0 : i32
    %20 = arith.cmpi eq, %arg1, %c0_i32_15 : i32
    %21 = arith.extui %20 : i1 to i32
    %c0_i32_16 = arith.constant 0 : i32
    %22 = arith.cmpi ne, %21, %c0_i32_16 : i32
    scf.if %22 {
      %c0_17 = arith.constant 0 : index
      %c0_18 = arith.constant 0 : index
      %23 = vector.load %arg7[%c0_17, %c0_18] : memref<8x128xf32, #tpu.memory_space<vmem>>, vector<8x128xf32>
      %c0_19 = arith.constant 0 : index
      %c0_20 = arith.constant 0 : index
      %24 = vector.load %arg5[%c0_19, %c0_20] : memref<8x128xf32, #tpu.memory_space<vmem>>, vector<8x128xf32>
      tpu.vector_store %arg5[%c0_19, %c0_20], %23 {strides = array<i32>} : memref<8x128xf32, #tpu.memory_space<vmem>>, vector<8x128xf32>,
      %c0_21 = arith.constant 0 : index
      %c0_22 = arith.constant 0 : index
      %25 = vector.load %arg8[%c0_21, %c0_22] : memref<8x128xf32, #tpu.memory_space<vmem>>, vector<8x128xf32>
      %c0_23 = arith.constant 0 : index
      %c0_24 = arith.constant 0 : index
      %26 = vector.load %arg6[%c0_23, %c0_24] : memref<8x128xf32, #tpu.memory_space<vmem>>, vector<8x128xf32>
      tpu.vector_store %arg6[%c0_23, %c0_24], %25 {strides = array<i32>} : memref<8x128xf32, #tpu.memory_space<vmem>>, vector<8x128xf32>,
    } else {
    }
    return
  }
  func.func @transform_0(%arg0: i32, %arg1: i32) -> (i32, i32) {
    %c1_i32 = arith.constant 1 : i32
    %0 = arith.muli %arg0, %c1_i32 : i32
    %1 = arith.addi %0, %arg1 : i32
    %c0_i32 = arith.constant 0 : i32
    %c0_i32_0 = arith.constant 0 : i32
    return %1, %c0_i32 : i32, i32
  }
  func.func @transform_1(%arg0: i32, %arg1: i32) -> (i32, i32) {
    %c1_i32 = arith.constant 1 : i32
    %0 = arith.muli %arg0, %c1_i32 : i32
    %1 = arith.addi %0, %arg1 : i32
    %c0_i32 = arith.constant 0 : i32
    %c0_i32_0 = arith.constant 0 : i32
    return %1, %c0_i32 : i32, i32
  }
  func.func @transform_2(%arg0: i32, %arg1: i32) -> (i32, i32) {
    %c1_i32 = arith.constant 1 : i32
    %0 = arith.muli %arg0, %c1_i32 : i32
    %1 = arith.addi %0, %arg1 : i32
    %c0_i32 = arith.constant 0 : i32
    %c0_i32_0 = arith.constant 0 : i32
    return %1, %c0_i32 : i32, i32
  }
  func.func @transform_3(%arg0: i32, %arg1: i32) -> (i32, i32) {
    %c0_i32 = arith.constant 0 : i32
    %c0_i32_0 = arith.constant 0 : i32
    return %arg0, %c0_i32 : i32, i32
  }
  func.func @transform_4(%arg0: i32, %arg1: i32) -> (i32, i32) {
    %c0_i32 = arith.constant 0 : i32
    %c0_i32_0 = arith.constant 0 : i32
    return %arg0, %c0_i32 : i32, i32
  }
}

</mosaic_0001>

<llo_original>
// kernel: tpu_custom_call.1
$region0: #{tpu_custom_call.1}
  #allocation0 [shape = 'u32[]', space=smem, size = 0x4, offset = 0x4, fixed_abs, tag = 'smem constant byte address 0x4 - core index']
  #allocation1 [shape = 'u32[72,128]{1,0:T(1,128)}', space=vmem, size = 0x9000, scoped, tag = 'internal scratch']
  #allocation2 [shape = 'f32[8,128]{1,0:T(8,128)}', space=vmem, size = 0x1000, scoped, tag = 'scratch operand']
  #allocation3 [shape = 'f32[8,128]{1,0:T(8,128)}', space=vmem, size = 0x1000, scoped, tag = 'scratch operand']
  %s0 = inlined_call_operand.hbm [shape: f32[48,128], index: 0, kind: input, shape index: {}]
  %s1 = inlined_call_operand.hbm [shape: f32[48,128], index: 1, kind: input, shape index: {}]
  %s2 = inlined_call_operand.hbm [shape: f32[48,128], index: 2, kind: input, shape index: {}]
  %s3 = inlined_call_operand.hbm [shape: f32[8,128], index: 3, kind: output, shape index: {0}]
  %s4 = inlined_call_operand.hbm [shape: f32[8,128], index: 4, kind: output, shape index: {1}]
  %5 = xla_tuple %s3, %s4
  %s6 = sld [smem:[#allocation0]]
  $region50: #{tpu_custom_call.1} parent=0
    _
  %s8 = ssub.s32 1, %s6
  %s9 = scalar_select 0, %s8, %s6
  $region1: #{tpu_custom_call.1} parent=0
    #allocation4 [shape = 'u8[24576]{0}', space=vmem, size = 0x6000, scoped, tag = 'input window, operand 0, single buffered']
    #allocation5 [shape = 's32[1]{0}', space=sflag, size = 0x4, scoped, tag = 'scoped memory for tpu_custom_call.1']
    #allocation6 [shape = 's32[1]{0}', space=sflag, size = 0x4, scoped, tag = 'scoped memory for tpu_custom_call.1']
    #allocation7 [shape = 'u8[24576]{0}', space=vmem, size = 0x6000, scoped, tag = 'input window, operand 1, single buffered']
    #allocation8 [shape = 's32[1]{0}', space=sflag, size = 0x4, scoped, tag = 'scoped memory for tpu_custom_call.1']
    #allocation9 [shape = 'u8[24576]{0}', space=vmem, size = 0x6000, scoped, tag = 'input window, operand 2, single buffered']
    #allocation10 [shape = 'u8[4096]{0}', space=vmem, size = 0x1000, scoped, tag = 'output window, operand 0, single buffered']
    #allocation11 [shape = 'u8[4096]{0}', space=vmem, size = 0x1000, scoped, tag = 'output window, operand 1, single buffered']
    #allocation12 [shape = 's32[1]{0}', space=sflag, size = 0x4, scoped, tag = 'scoped memory for tpu_custom_call.1']
    %10 = vsyncpa [#allocation5], 0
    %11 = vsyncpa [#allocation8], 0
    %12 = vsyncpa [#allocation6], 0
    %13 = vsyncpa [#allocation12], 0
    // Predicated region
    $region2: #{tpu_custom_call.1} parent=1 // pred_check
      _
    $region3: #{tpu_custom_call.1} parent=1 // pred_check_branch
      %15 = sbr.rel (0) target = $region5
    $region4: #{tpu_custom_call.1} parent=1 // pred_region
      %s16 = sadd.s32 0, 0
      %s17 = smul.u32 6, %s16
      %19 = vsyncadd [#allocation5], 0
      %s20 = smul.addr %s17, 8
      %s21 = scalar_lea.hbm %s0, %s20
      %s22 = sshll.u32 %s21, 4
      %s23 = int_to_ptr.hbm [resolvable:$true] %s22
      %s24 = sshll.u32 [#allocation4], 4
      %s25 = int_to_ptr.vmem [resolvable:$true] %s24
      %30 = dma.hbm_to_vmem [thread:$0]  %s23, 768, %s25, [#allocation5], 128, 128, 8
    $region5: #{tpu_custom_call.1} parent=1 // pred_fallthru
      _
    // Predicated region
    $region6: #{tpu_custom_call.1} parent=1 // pred_check
      _
    $region7: #{tpu_custom_call.1} parent=1 // pred_check_branch
      %32 = sbr.rel (0) target = $region9
    $region8: #{tpu_custom_call.1} parent=1 // pred_region
      %s33 = sadd.s32 0, 0
      %s34 = smul.u32 6, %s33
      %36 = vsyncadd [#allocation8], 0
      %s37 = smul.addr %s34, 8
      %s38 = scalar_lea.hbm %s1, %s37
      %s39 = sshll.u32 %s38, 4
      %s40 = int_to_ptr.hbm [resolvable:$true] %s39
      %s41 = sshll.u32 [#allocation7], 4
      %s42 = int_to_ptr.vmem [resolvable:$true] %s41
      %47 = dma.hbm_to_vmem [thread:$0]  %s40, 768, %s42, [#allocation8], 128, 128, 8
    $region9: #{tpu_custom_call.1} parent=1 // pred_fallthru
      _
    // Predicated region
    $region10: #{tpu_custom_call.1} parent=1 // pred_check
      _
    $region11: #{tpu_custom_call.1} parent=1 // pred_check_branch
      %49 = sbr.rel (0) target = $region13
    $region12: #{tpu_custom_call.1} parent=1 // pred_region
      %s50 = sadd.s32 0, 0
      %s51 = smul.u32 6, %s50
      %53 = vsyncadd [#allocation8], 0
      %s54 = smul.addr %s51, 8
      %s55 = scalar_lea.hbm %s2, %s54
      %s56 = sshll.u32 %s55, 4
      %s57 = int_to_ptr.hbm [resolvable:$true] %s56
      %s58 = sshll.u32 [#allocation9], 4
      %s59 = int_to_ptr.vmem [resolvable:$true] %s58
      %64 = dma.hbm_to_vmem [thread:$0]  %s57, 768, %s59, [#allocation8], 128, 128, 8
    $region13: #{tpu_custom_call.1} parent=1 // pred_fallthru
      _
    // Predicated region
    $region14: #{tpu_custom_call.1} parent=1 // pred_check
      _
    $region15: #{tpu_custom_call.1} parent=1 // pred_check_branch
      %66 = sbr.rel (0) target = $region17
    $region16: #{tpu_custom_call.1} parent=1 // pred_region
      %68 = dma.done [#allocation5], 768
    $region17: #{tpu_custom_call.1} parent=1 // pred_fallthru
      _
    // Predicated region
    $region18: #{tpu_custom_call.1} parent=1 // pred_check
      _
    $region19: #{tpu_custom_call.1} parent=1 // pred_check_branch
      %70 = sbr.rel (0) target = $region21
    $region20: #{tpu_custom_call.1} parent=1 // pred_region
      %72 = dma.done [#allocation8], 768
    $region21: #{tpu_custom_call.1} parent=1 // pred_fallthru
      _
    // Predicated region
    $region22: #{tpu_custom_call.1} parent=1 // pred_check
      _
    $region23: #{tpu_custom_call.1} parent=1 // pred_check_branch
      %74 = sbr.rel (0) target = $region25
    $region24: #{tpu_custom_call.1} parent=1 // pred_region
      %76 = dma.done [#allocation8], 768
    $region25: #{tpu_custom_call.1} parent=1 // pred_fallthru
      _
    %s77 = sadd.s32 0, 0
    %s78 = smul.u32 6, %s77
    %s79 = sadd.s32 0, 0
    %s80 = smul.u32 6, %s79
    %s81 = sadd.s32 0, 0
    %s82 = smul.u32 6, %s81
    %p83 = scmp.eq.s32.totalorder 0, 0
    // Predicated region
    $region26: #{tpu_custom_call.1} parent=1 // pred_check
      %p84 = pneg %p83
    $region27: #{tpu_custom_call.1} parent=1 // pred_check_branch
      %86 = sbr.rel (%p84) target = $region29
    $region28: #{tpu_custom_call.1} parent=1 // pred_region
      %87 = vst [vmem:[#allocation2] sm:$0xff] 0.0
      %88 = vst [vmem:[#allocation3] sm:$0xff] 0.0
    $region29: #{tpu_custom_call.1} parent=1 // pred_fallthru
      _
    %v89 = vld [vmem:[#allocation9] sm:$0xff]
    %v90 = vld [vmem:[#allocation9 + $0x8] sm:$0xff]
    %v91 = vld [vmem:[#allocation9 + $0x10] sm:$0xff]
    %v92 = vld [vmem:[#allocation9 + $0x18] sm:$0xff]
    %v93 = vld [vmem:[#allocation9 + $0x20] sm:$0xff]
    %v94 = vld [vmem:[#allocation9 + $0x28] sm:$0xff]
    %v95 = vld [vmem:[#allocation4] sm:$0xff]
    %v96 = vld [vmem:[#allocation4 + $0x8] sm:$0xff]
    %v97 = vld [vmem:[#allocation4 + $0x10] sm:$0xff]
    %v98 = vld [vmem:[#allocation4 + $0x18] sm:$0xff]
    %v99 = vld [vmem:[#allocation4 + $0x20] sm:$0xff]
    %v100 = vld [vmem:[#allocation4 + $0x28] sm:$0xff]
    %v101 = vsub.f32 %v95, %v89
    %v102 = vsub.f32 %v96, %v90
    %v103 = vsub.f32 %v97, %v91
    %v104 = vsub.f32 %v98, %v92
    %v105 = vsub.f32 %v99, %v93
    %v106 = vsub.f32 %v100, %v94
    %v107 = vmul.f32 %v101, %v101
    %v108 = vmul.f32 %v102, %v102
    %v109 = vmul.f32 %v103, %v103
    %v110 = vmul.f32 %v104, %v104
    %v111 = vmul.f32 %v105, %v105
    %v112 = vmul.f32 %v106, %v106
    %v113 = vld [vmem:[#allocation2] sm:$0xff]
    %v114 = vadd.f32 %v107, %v108
    %v115 = vadd.f32 %v114, %v109
    %v116 = vadd.f32 %v115, %v110
    %v117 = vadd.f32 %v116, %v111
    %v118 = vadd.f32 %v117, %v112
    %v119 = vadd.f32 %v113, %v118
    %120 = vst [vmem:[#allocation2] sm:$0xff] %v119
    %v121 = vld [vmem:[#allocation7] sm:$0xff]
    %v122 = vld [vmem:[#allocation7 + $0x8] sm:$0xff]
    %v123 = vld [vmem:[#allocation7 + $0x10] sm:$0xff]
    %v124 = vld [vmem:[#allocation7 + $0x18] sm:$0xff]
    %v125 = vld [vmem:[#allocation7 + $0x20] sm:$0xff]
    %v126 = vld [vmem:[#allocation7 + $0x28] sm:$0xff]
    %v127 = vsub.f32 %v121, %v89
    %v128 = vsub.f32 %v122, %v90
    %v129 = vsub.f32 %v123, %v91
    %v130 = vsub.f32 %v124, %v92
    %v131 = vsub.f32 %v125, %v93
    %v132 = vsub.f32 %v126, %v94
    %v133 = vmul.f32 %v127, %v127
    %v134 = vmul.f32 %v128, %v128
    %v135 = vmul.f32 %v129, %v129
    %v136 = vmul.f32 %v130, %v130
    %v137 = vmul.f32 %v131, %v131
    %v138 = vmul.f32 %v132, %v132
    %v139 = vld [vmem:[#allocation3] sm:$0xff]
    %v140 = vadd.f32 %v133, %v134
    %v141 = vadd.f32 %v140, %v135
    %v142 = vadd.f32 %v141, %v136
    %v143 = vadd.f32 %v142, %v137
    %v144 = vadd.f32 %v143, %v138
    %v145 = vadd.f32 %v139, %v144
    %146 = vst [vmem:[#allocation3] sm:$0xff] %v145
    // Predicated region
    $region30: #{tpu_custom_call.1} parent=1 // pred_check
      %p147 = pneg %p83
    $region31: #{tpu_custom_call.1} parent=1 // pred_check_branch
      %149 = sbr.rel (%p147) target = $region33
    $region32: #{tpu_custom_call.1} parent=1 // pred_region
      %v150 = vld [vmem:[#allocation2] sm:$0xff]
      %151 = vst [vmem:[#allocation10] sm:$0xff] %v150
      %v152 = vld [vmem:[#allocation3] sm:$0xff]
      %153 = vst [vmem:[#allocation11] sm:$0xff] %v152
    $region33: #{tpu_custom_call.1} parent=1 // pred_fallthru
      _
    // Predicated region
    $region34: #{tpu_custom_call.1} parent=1 // pred_check
      _
    $region35: #{tpu_custom_call.1} parent=1 // pred_check_branch
      %155 = sbr.rel (0) target = $region37
    $region36: #{tpu_custom_call.1} parent=1 // pred_region
      %157 = vsyncadd [#allocation6], 0
      %s159 = sshll.u32 [#allocation10], 4
      %s160 = int_to_ptr.vmem [resolvable:$true] %s159
      %s161 = sshll.u32 %s3, 4
      %s162 = int_to_ptr.hbm [resolvable:$true] %s161
      %164 = dma.vmem_to_hbm [thread:$0]  %s160, 128, %s162, [#allocation6]
    $region37: #{tpu_custom_call.1} parent=1 // pred_fallthru
      _
    // Predicated region
    $region38: #{tpu_custom_call.1} parent=1 // pred_check
      _
    $region39: #{tpu_custom_call.1} parent=1 // pred_check_branch
      %166 = sbr.rel (0) target = $region41
    $region40: #{tpu_custom_call.1} parent=1 // pred_region
      %168 = vsyncadd [#allocation12], 0
      %s170 = sshll.u32 [#allocation11], 4
      %s171 = int_to_ptr.vmem [resolvable:$true] %s170
      %s172 = sshll.u32 %s4, 4
      %s173 = int_to_ptr.hbm [resolvable:$true] %s172
      %175 = dma.vmem_to_hbm [thread:$0]  %s171, 128, %s173, [#allocation12]
    $region41: #{tpu_custom_call.1} parent=1 // pred_fallthru
      _
    // Predicated region
    $region42: #{tpu_custom_call.1} parent=1 // pred_check
      _
    $region43: #{tpu_custom_call.1} parent=1 // pred_check_branch
      %177 = sbr.rel (0) target = $region45
    $region44: #{tpu_custom_call.1} parent=1 // pred_region
      %179 = dma.done [#allocation6], 128
    $region45: #{tpu_custom_call.1} parent=1 // pred_fallthru
      _
    // Predicated region
    $region46: #{tpu_custom_call.1} parent=1 // pred_check
      _
    $region47: #{tpu_custom_call.1} parent=1 // pred_check_branch
      %181 = sbr.rel (0) target = $region49
    $region48: #{tpu_custom_call.1} parent=1 // pred_region
      %183 = dma.done [#allocation12], 128
    $region49: #{tpu_custom_call.1} parent=1 // pred_fallthru
      _
    %184 = vsyncpa [#allocation5], 1
    %185 = vsyncpa [#allocation8], 1
    %186 = vsyncpa [#allocation6], 1
    %187 = vsyncpa [#allocation12], 1

</llo_original>
